<compile_context>
chip_gen: v7x
topology: tpu7x:2x2x1
jax: 0.10.0
libtpu: 0.0.40
codegen_flags: <defaults>
</compile_context>

<pallas_src>
import functools
import math

import jax
import jax.numpy as jnp
from jax import lax
from jax.experimental import pallas as pl
from jax.experimental.pallas import tpu as pltpu

_NEG_BIG = -1e30   # finite stand-in for -inf (avoids inf - inf -> NaN)


# --------------------------------------------------------------------------- #
# Kernel
# --------------------------------------------------------------------------- #
def _log_target_kernel(scale_ref, bias_ref, m0_ref, m1_ref, out_ref,
                       m_ref, l_ref, *, tr, tc, n_col_tiles, n_valid, n_padded,
                       log_pos_w, log_neg_w, resident):
    """Grid = (row_tiles, col_tiles); the column axis is the reduction axis."""
    i = pl.program_id(0)
    j = pl.program_id(1)
    needs_col_mask = (n_padded != n_valid)

    # Rotated column schedule: column step 0 is the block that holds row tile
    # i's diagonal.  col_start is the element offset of this step's columns.
    row_start = i * tr
    off = row_start % tc                                   # diag's local column
    col_start = (row_start - off + j * tc) % n_padded      # multiple of tc

    if resident:
        # m1 lives in VMEM for the whole kernel (single HBM read); slice the
        # (tc, d) column block directly out of the resident copy.
        m1_tile = m1_ref[pl.ds(pl.multiple_of(col_start, tc), tc), :]
    else:
        m1_tile = m1_ref[...]

    # (tr, tc) logits.  logit_scale is applied to the f32 matmul result so
    # bf16 features are never re-rounded after scaling.
    logits = lax.dot_general(
        m0_ref[...], m1_tile,
        dimension_numbers=(((1,), (1,)), ((), ())),
        preferred_element_type=jnp.float32) * scale_ref[0]

    def _mask_cols(wl):
        if not needs_col_mask:
            return wl
        col = lax.broadcasted_iota(jnp.int32, (tr, tc), 1) + col_start
        return jnp.where(col < n_valid, wl, _NEG_BIG)

    @pl.when(j == 0)
    def _diag_tile():                   # init + (possibly) weighted diagonal
        if log_pos_w == log_neg_w:
            wl = logits if log_neg_w == 0.0 else logits + log_neg_w
        else:
            row = lax.broadcasted_iota(jnp.int32, (tr, tc), 0)
            col = lax.broadcasted_iota(jnp.int32, (tr, tc), 1)
            wl = logits + jnp.where(col == row + off, log_pos_w, log_neg_w)
        wl = _mask_cols(wl)
        m_new = jnp.max(wl, axis=-1, keepdims=True)
        l_ref[...] = jnp.sum(jnp.exp(wl - m_new), axis=-1, keepdims=True)
        m_ref[...] = m_new

    @pl.when(j != 0)
    def _off_diag_tile():               # online weighted log-sum-exp update
        wl = logits if log_neg_w == 0.0 else logits + log_neg_w
        wl = _mask_cols(wl)
        m_prev = m_ref[...]
        m_new = jnp.maximum(m_prev, jnp.max(wl, axis=-1, keepdims=True))
        l_ref[...] = (l_ref[...] * jnp.exp(m_prev - m_new)
                      + jnp.sum(jnp.exp(wl - m_new), axis=-1, keepdims=True))
        m_ref[...] = m_new

    @pl.when(j == n_col_tiles - 1)
    def _finalize():                    # logit_bias folded in once per row
        out_ref[...] = m_ref[...] + jnp.log(l_ref[...]) + bias_ref[0]


# --------------------------------------------------------------------------- #
# Sizing helpers
# --------------------------------------------------------------------------- #
def _round_up(x, m):
    return ((x + m - 1) // m) * m


def _device_kind():
    try:
        return jax.devices()[0].device_kind.lower()
    except Exception:
        return ""


def _vmem_budget(kind):
    """(planning budget, vmem_limit cap) in bytes per TensorCore."""
    if "v7" in kind:
        return 40 << 20, 56 << 20          # v7x: 64 MiB physical VMEM per TC
    if "v2" in kind or "v3" in kind:
        return 10 << 20, 14 << 20
    if "v4" in kind or "v5" in kind or "v6" in kind:
        return 96 << 20, 110 << 20         # 128 MiB physical VMEM
    return 40 << 20, 56 << 20              # unknown / future: be conservative


# --------------------------------------------------------------------------- #
# Kernel wrapper
# --------------------------------------------------------------------------- #
def cross_batch_log_lse(m0_features, m1_features, logit_scale, logit_bias, *,
                        log_diag_w=0.0, log_off_w=0.0,
                        block_rows=None, block_cols=None, force_streamed=False):
    """log( sum_j exp(log_w_ij) * exp(scale*<m0_i, m1_j> + bias) ) per row i."""
    n, d = m0_features.shape
    assert m1_features.shape == (n, d), (m0_features.shape, m1_features.shape)
    itemsize = jnp.dtype(m0_features.dtype).itemsize

    kind = _device_kind()
    budget, vmem_cap = _vmem_budget(kind)
    two_core = "v7" in kind            # v7x: 2 TensorCores -> want >= 2 row tiles

    # ------------------------- row tile + padding --------------------------- #
    if block_rows is not None:
        tr = int(block_rows)
        assert tr >= 8 and tr % 8 == 0, f"block_rows={tr} must be a multiple of 8"
        np_ = _round_up(n, tr)
    elif n <= 256:
        np_ = _round_up(n, 8)
        tr = np_
        if two_core and np_ >= 16 and np_ % 16 == 0:
            tr = np_ // 2              # keep both v7x TensorCores busy
    else:
        tr = 256                       # MXU M-dim tile (multiple of 128 for v5e)
        np_ = _round_up(n, tr)
    n_row_tiles = np_ // tr

    # --------------------- residency + column tile -------------------------- #
    m1_bytes = np_ * d * itemsize
    fixed = 2 * tr * d * itemsize + (64 << 10)             # double-buffered m0 rows
    resident = (not force_streamed) and (m1_bytes + fixed + 6 * tr * tr * 4 <= budget)

    if block_cols is not None:
        tc = int(block_cols)
    else:
        tc_target = 2048 if resident else 1024             # wide TC amortizes the
        tc = tr                                            # per-step (tr,1) bookkeeping
        for c in range(1, np_ // tr + 1):
            cand = c * tr
            if cand > tc_target:
                break
            if np_ % cand != 0:
                continue
            m1_vmem = m1_bytes if resident else 2 * cand * d * itemsize
            if m1_vmem + fixed + 6 * tr * cand * 4 <= budget:
                tc = cand
    assert np_ % tc == 0, f"column tile {tc} must divide padded N={np_}"
    n_col_tiles = np_ // tc
    assert n_col_tiles == 1 or tc % tr == 0, (
        "column tile must be a multiple of the row tile so each row tile's "
        "diagonal lives in a single column block")

    # ---------------------------- VMEM request ------------------------------ #
    m1_vmem = m1_bytes if resident else 2 * tc * d * itemsize
    est = m1_vmem + fixed + 8 * tr * tc * 4 + 4 * tr * 4
    vmem_limit = int(min(vmem_cap, max(32 << 20, int(1.25 * est))))

    # ------------------------- pad to the tile grid ------------------------- #
    if np_ != n:
        m0_features = jnp.pad(m0_features, ((0, np_ - n), (0, 0)))
        m1_features = jnp.pad(m1_features, ((0, np_ - n), (0, 0)))

    scale = jnp.asarray(logit_scale, jnp.float32).reshape(1)
    bias = jnp.asarray(logit_bias, jnp.float32).reshape(1)

    kernel = functools.partial(
        _log_target_kernel, tr=tr, tc=tc, n_col_tiles=n_col_tiles,
        n_valid=n, n_padded=np_, log_pos_w=float(log_diag_w),
        log_neg_w=float(log_off_w), resident=resident)

    if resident:
        # Whole m1 in VMEM: HBM traffic drops from n_row_tiles*N*D to N*D.
        m1_spec = pl.BlockSpec(memory_space=pltpu.MemorySpace.VMEM)
    else:
        ratio = tc // tr
        if ratio == 1:
            m1_index = lambda i, j: ((i + j) % n_col_tiles, 0)
        else:
            m1_index = lambda i, j: ((i // ratio + j) % n_col_tiles, 0)
        m1_spec = pl.BlockSpec((tc, d), m1_index)

    out = pl.pallas_call(
        kernel,
        out_shape=jax.ShapeDtypeStruct((np_, 1), jnp.float32),
        grid=(n_row_tiles, n_col_tiles),
        in_specs=[
            pl.BlockSpec(memory_space=pltpu.MemorySpace.SMEM),   # logit_scale (1,)
            pl.BlockSpec(memory_space=pltpu.MemorySpace.SMEM),   # logit_bias  (1,)
            pl.BlockSpec((tr, d), lambda i, j: (i, 0)),          # m0 rows, resident over j
            m1_spec,
        ],
        # TODO(synk): a lane-dense (n_row_tiles, tr) output would avoid the
        # (tr, 1) masked stores; total writeback is only N*4 bytes so left as-is.
        out_specs=pl.BlockSpec((tr, 1), lambda i, j: (i, 0)),
        scratch_shapes=[
            pltpu.VMEM((tr, 1), jnp.float32),    # running max
            pltpu.VMEM((tr, 1), jnp.float32),    # running sum
        ],
        compiler_params=pltpu.CompilerParams(
            dimension_semantics=("parallel", "arbitrary"),
            vmem_limit_bytes=vmem_limit,
        ),
    )(scale, bias, m0_features, m1_features)
    return out[:n, 0]


# --------------------------------------------------------------------------- #
# Module-level forward (single device, world_size == 1)
# --------------------------------------------------------------------------- #
def get_cross_batch_pallas(image_features, text_features, logit_scale, logit_bias,
                           *, is_same_batch=True, pos_coef=1.0,
                           mask_diagonal=False, **tiling):
    """Pallas equivalent of get_cross_batch (dist_matrix is never materialized)."""
    if is_same_batch and mask_diagonal:
        log_diag_w = _NEG_BIG
    elif is_same_batch and pos_coef > 0:
        log_diag_w = math.log(float(pos_coef))
    else:
        log_diag_w = 0.0
    log_img = cross_batch_log_lse(image_features, text_features, logit_scale,
                                  logit_bias, log_diag_w=log_diag_w,
                                  log_off_w=0.0, **tiling)
    log_txt = cross_batch_log_lse(text_features, image_features, logit_scale,
                                  logit_bias, log_diag_w=log_diag_w,
                                  log_off_w=0.0, **tiling)
    return {"cross_image_batch": jnp.exp(log_img),
            "cross_text_batch": jnp.exp(log_txt)}


def conditional_exp_loss_forward(image_features, text_features, logit_scale,
                                 logit_bias, log_lambda_image, log_lambda_text,
                                 rho=0.0, *, pos_coef=1.0, lambda_eps=1e-6,
                                 lambda_fit_neg_only=False, scale_loss=False,
                                 adaptive_tau=False):
    """Single-device (world_size == 1) forward of ConditionalExpLoss.

    TODO(synk): world_size > 1 neighbour_exchange ring (torch.distributed P2P;
    would be pltpu.make_async_remote_copy RDMA on TPU) is not implemented.
    """
    img32 = image_features.astype(jnp.float32)
    txt32 = text_features.astype(jnp.float32)
    lli = log_lambda_image + lambda_eps
    llt = log_lambda_text + lambda_eps
    lam_img = jnp.exp(lli)
    lam_txt = jnp.exp(llt)
    # exp_inner_prod(..., mean_exp=False): per-sample <image_i, text_i>.
    inner = jnp.sum(img32 * txt32, axis=-1)
    pos_exp = lax.stop_gradient(jnp.exp(inner * logit_scale + logit_bias))
    exp_joint = jnp.mean(inner * 2.0) * logit_scale

    cb = get_cross_batch_pallas(image_features, text_features, logit_scale,
                                logit_bias, is_same_batch=True,
                                pos_coef=pos_coef, mask_diagonal=False)
    if pos_coef > 0 and lambda_fit_neg_only:
        lam_img = lam_img + pos_exp * pos_coef
        lam_txt = lam_txt + pos_exp * pos_coef
    exp_cross = (jnp.mean(cb["cross_image_batch"] / lam_img)
                 + jnp.mean(cb["cross_text_batch"] / lam_txt))
    total_loss = -exp_joint + exp_cross
    if scale_loss:
        total_loss = total_loss / lax.stop_gradient(logit_scale) + rho / logit_scale
        if adaptive_tau:
            bsz = log_lambda_image.shape[0]
            total_loss = total_loss + lax.stop_gradient(
                -exp_joint + jnp.mean(lli + llt) - 2.0 * math.log(bsz)
            ) / logit_scale
    return {"total_loss": total_loss, "joint_loss": exp_joint,
            "cross_loss": exp_cross}


# --------------------------------------------------------------------------- #
# Pure-JAX references (for correctness checks only)
# --------------------------------------------------------------------------- #
def _reference_log_lse(m0, m1, scale, bias, log_diag_w, log_off_w):
    logits = jnp.dot(m0, m1.T, preferred_element_type=jnp.float32) * scale + bias
    n = logits.shape[0]
    w = jnp.where(jnp.eye(n, dtype=bool), jnp.float32(log_diag_w),
                  jnp.float32(log_off_w))
    return jax.scipy.special.logsumexp(logits + w, axis=-1)


def _reference_forward(image_features, text_features, logit_scale, logit_bias,
                       log_lambda_image, log_lambda_text, rho, *, pos_coef=1.0,
                       lambda_eps=1e-6, lambda_fit_neg_only=False,
                       scale_loss=False, adaptive_tau=False):
    img = image_features.astype(jnp.float32)
    txt = text_features.astype(jnp.float32)
    lli = log_lambda_image + lambda_eps
    llt = log_lambda_text + lambda_eps
    lam_img = jnp.exp(lli)
    lam_txt = jnp.exp(llt)
    inner = jnp.sum(img * txt, axis=-1)
    pos_exp = jnp.exp(inner * logit_scale + logit_bias)
    exp_joint = jnp.mean(inner * 2.0) * logit_scale
    logits = (jnp.dot(image_features, text_features.T,
                      preferred_element_type=jnp.float32) * logit_scale
              + logit_bias)
    n = logits.shape[0]
    if pos_coef > 0:
        logits = logits + jnp.where(jnp.eye(n, dtype=bool),
                                    jnp.float32(math.log(pos_coef)), 0.0)
    cib = jnp.exp(jax.scipy.special.logsumexp(logits, axis=-1))
    ctb = jnp.exp(jax.scipy.special.logsumexp(logits, axis=0))
    if pos_coef > 0 and lambda_fit_neg_only:
        lam_img = lam_img + pos_exp * pos_coef
        lam_txt = lam_txt + pos_exp * pos_coef
    exp_cross = jnp.mean(cib / lam_img) + jnp.mean(ctb / lam_txt)
    total = -exp_joint + exp_cross
    if scale_loss:
        total = total / logit_scale + rho / logit_scale
        if adaptive_tau:
            bsz = log_lambda_image.shape[0]
            total = total + (-exp_joint + jnp.mean(lli + llt)
                             - 2.0 * math.log(bsz)) / logit_scale
    return {"total_loss": total, "joint_loss": exp_joint, "cross_loss": exp_cross}


# --------------------------------------------------------------------------- #
# Tests
# --------------------------------------------------------------------------- #
if __name__ == "__main__":
    key = jax.random.PRNGKey(0)
    k0, k1, k2, k3, k4, k5, k6, k7 = jax.random.split(key, 8)

    # ---- test 1: small f32 batch, single resident tile ----------------------
    N, D = 8, 32
    m0 = jax.random.normal(k0, (N, D), jnp.float32)
    m1 = jax.random.normal(k1, (N, D), jnp.float32)
    m0 = m0 / jnp.linalg.norm(m0, axis=-1, keepdims=True)   # CLIP-style features
    m1 = m1 / jnp.linalg.norm(m1, axis=-1, keepdims=True)
    logit_scale = jnp.float32(10.0)
    logit_bias = jnp.float32(-5.0)

    out = jax.block_until_ready(cross_batch_log_lse(m0, m1, logit_scale, logit_bias))
    ref = _reference_log_lse(m0, m1, logit_scale, logit_bias, 0.0, 0.0)
    assert out.shape == (N,)
    assert jnp.allclose(out, ref, atol=1e-4, rtol=1e-4), (out, ref)

    # ---- test 2: masked diagonal (positives dropped from the target) --------
    out2 = jax.block_until_ready(
        cross_batch_log_lse(m0, m1, logit_scale, logit_bias, log_diag_w=_NEG_BIG))
    ref2 = _reference_log_lse(m0, m1, logit_scale, logit_bias, _NEG_BIG, 0.0)
    assert jnp.allclose(out2, ref2, atol=1e-4, rtol=1e-4), (out2, ref2)

    # ---- test 3: bf16, resident m1, 4x2 rectangular tile grid, weighted diag -
    N2, D2 = 256, 64
    a = jax.random.normal(k2, (N2, D2), jnp.float32)
    b = jax.random.normal(k3, (N2, D2), jnp.float32)
    a = (a / jnp.linalg.norm(a, axis=-1, keepdims=True)).astype(jnp.bfloat16)
    b = (b / jnp.linalg.norm(b, axis=-1, keepdims=True)).astype(jnp.bfloat16)
    s2, b2 = jnp.float32(5.0), jnp.float32(-2.0)
    ldw, low = math.log(0.5), math.log(2.0)   # pos_coef=0.5, world-size-2 negatives
    out3 = jax.block_until_ready(
        cross_batch_log_lse(a, b, s2, b2, log_diag_w=ldw, log_off_w=low,
                            block_rows=64, block_cols=128))
    ref3 = _reference_log_lse(a, b, s2, b2, ldw, low)
    assert out3.shape == (N2,)
    assert jnp.allclose(out3, ref3, atol=5e-3, rtol=5e-3), (out3, ref3)

    # ---- test 4: streamed (non-resident) fallback, rotated column schedule ---
    out4 = jax.block_until_ready(
        cross_batch_log_lse(a, b, s2, b2, log_diag_w=ldw, log_off_w=low,
                            block_rows=128, block_cols=128, force_streamed=True))
    assert jnp.allclose(out4, ref3, atol=5e-3, rtol=5e-3), (out4, ref3)

    # ---- test 5: N not divisible by the tile -> padded + column-masked path --
    N3, D3 = 100, 48
    c0 = jax.random.normal(k4, (N3, D3), jnp.float32)
    c1 = jax.random.normal(k5, (N3, D3), jnp.float32)
    c0 = c0 / jnp.linalg.norm(c0, axis=-1, keepdims=True)
    c1 = c1 / jnp.linalg.norm(c1, axis=-1, keepdims=True)
    out5 = jax.block_until_ready(
        cross_batch_log_lse(c0, c1, logit_scale, logit_bias))
    ref5 = _reference_log_lse(c0, c1, logit_scale, logit_bias, 0.0, 0.0)
    assert out5.shape == (N3,)
    assert jnp.allclose(out5, ref5, atol=1e-4, rtol=1e-4), (out5, ref5)

    # ---- test 6: full ConditionalExpLoss forward (single device) -------------
    log_li = 0.1 * jax.random.normal(k6, (N,), jnp.float32) + 2.0
    log_lt = 0.1 * jax.random.normal(k7, (N,), jnp.float32) + 2.0
    got = conditional_exp_loss_forward(
        m0, m1, logit_scale, logit_bias, log_li, log_lt, rho=0.05,
        pos_coef=1.0, lambda_fit_neg_only=False,
        scale_loss=True, adaptive_tau=True)
    got = jax.block_until_ready(got)
    want = _reference_forward(
        m0, m1, logit_scale, logit_bias, log_li, log_lt, 0.05,
        pos_coef=1.0, lambda_fit_neg_only=False,
        scale_loss=True, adaptive_tau=True)
    for kname in ("total_loss", "joint_loss", "cross_loss"):
        assert jnp.allclose(got[kname], want[kname], atol=1e-3, rtol=1e-4), (
            kname, got[kname], want[kname])

    print("KERNEL_OK")
</pallas_src>

<mosaic_0001>
module attributes {stable_mosaic.version = 11 : i64} {
  func.func @_log_target_kernel(%arg0: i32, %arg1: i32, %arg2: memref<1xf32, #tpu.memory_space<smem>>, %arg3: memref<1xf32, #tpu.memory_space<smem>>, %arg4: memref<8x32xf32, #tpu.memory_space<vmem>>, %arg5: memref<8x32xf32, #tpu.memory_space<vmem>>, %arg6: memref<8x1xf32, #tpu.memory_space<vmem>>, %arg7: memref<8x1xf32, #tpu.memory_space<vmem>>, %arg8: memref<8x1xf32, #tpu.memory_space<vmem>>) attributes {dimension_semantics = [#tpu.dimension_semantics<parallel>, #tpu.dimension_semantics<arbitrary>], iteration_bounds = array<i64: 1, 1>, scalar_prefetch = 0 : i64, scratch_operands = 2 : i64, tpu.core_type = #tpu.core_type<tc>, window_params = [{transform_indices = @transform_0, window_bounds = array<i64: 1>}, {transform_indices = @transform_1, window_bounds = array<i64: 1>}, {transform_indices = @transform_2, window_bounds = array<i64: 8, 32>}, {pipeline_mode = #tpu.pipeline_mode<synchronous>, transform_indices = @transform_3, window_bounds = array<i64: 8, 32>}, {transform_indices = @transform_4, window_bounds = array<i64: 8, 1>}]} {
    %c8_i32 = arith.constant 8 : i32
    %0 = arith.muli %arg0, %c8_i32 : i32
    %c8_i32_0 = arith.constant 8 : i32
    %c0_i32 = arith.constant 0 : i32
    %1 = arith.cmpi eq, %c8_i32_0, %c0_i32 : i32
    %c1_i32 = arith.constant 1 : i32
    %2 = arith.select %1, %c1_i32, %c8_i32_0 : i32
    %3 = arith.remsi %0, %2 : i32
    %c0_i32_1 = arith.constant 0 : i32
    %4 = arith.cmpi ne, %3, %c0_i32_1 : i32
    %c0_i32_2 = arith.constant 0 : i32
    %5 = arith.cmpi slt, %3, %c0_i32_2 : i32
    %c0_i32_3 = arith.constant 0 : i32
    %6 = arith.cmpi slt, %2, %c0_i32_3 : i32
    %7 = arith.xori %5, %6 : i1
    %8 = arith.andi %7, %4 : i1
    %9 = arith.addi %3, %2 : i32
    %10 = arith.select %8, %9, %3 : i32
    %11 = arith.subi %0, %10 : i32
    %c8_i32_4 = arith.constant 8 : i32
    %12 = arith.muli %arg1, %c8_i32_4 : i32
    %13 = arith.addi %11, %12 : i32
    %c8_i32_5 = arith.constant 8 : i32
    %c0_i32_6 = arith.constant 0 : i32
    %14 = arith.cmpi eq, %c8_i32_5, %c0_i32_6 : i32
    %c1_i32_7 = arith.constant 1 : i32
    %15 = arith.select %14, %c1_i32_7, %c8_i32_5 : i32
    %16 = arith.remsi %13, %15 : i32
    %c0_i32_8 = arith.constant 0 : i32
    %17 = arith.cmpi ne, %16, %c0_i32_8 : i32
    %c0_i32_9 = arith.constant 0 : i32
    %18 = arith.cmpi slt, %16, %c0_i32_9 : i32
    %c0_i32_10 = arith.constant 0 : i32
    %19 = arith.cmpi slt, %15, %c0_i32_10 : i32
    %20 = arith.xori %18, %19 : i1
    %21 = arith.andi %20, %17 : i1
    %22 = arith.addi %16, %15 : i32
    %23 = arith.select %21, %22, %16 : i32
    %24 = tpu.assume_multiple %23, 8 : i32
    %25 = arith.index_cast %24 : i32 to index
    %c0 = arith.constant 0 : index
    %26 = vector.load %arg5[%25, %c0] : memref<8x32xf32, #tpu.memory_space<vmem>>, vector<8x32xf32>
    %c0_11 = arith.constant 0 : index
    %c0_12 = arith.constant 0 : index
    %27 = vector.load %arg4[%c0_11, %c0_12] : memref<8x32xf32, #tpu.memory_space<vmem>>, vector<8x32xf32>
    %cst = arith.constant dense<0.000000e+00> : vector<8x8xf32>
    %28 = tpu.matmul %27, %26, %cst {dimension_numbers = #tpu.dot_dimension_numbers<[1], [1], [0], [0], [0, 0, 1, 0], [], []>} : vector<8x32xf32>, vector<8x32xf32>, vector<8x8xf32> -> vector<8x8xf32>
    %c0_13 = arith.constant 0 : index
    %29 = memref.load %arg2[%c0_13] : memref<1xf32, #tpu.memory_space<smem>>
    %30 = vector.broadcast %29 : f32 to vector<8x8xf32>
    %31 = arith.mulf %28, %30 : vector<8x8xf32>
    %c0_i32_14 = arith.constant 0 : i32
    %32 = arith.cmpi eq, %arg1, %c0_i32_14 : i32
    %33 = arith.extui %32 : i1 to i32
    %c0_i32_15 = arith.constant 0 : i32
    %34 = arith.cmpi ne, %33, %c0_i32_15 : i32
    scf.if %34 {
      %cst_20 = arith.constant dense<0xFF800000> : vector<8xf32>
      %41 = vector.multi_reduction <maximumf>, %31, %cst_20 [1] : vector<8x8xf32> to vector<8xf32>
      %42 = vector.shape_cast %41 : vector<8xf32> to vector<8x1xf32>
      %43 = vector.broadcast %42 : vector<8x1xf32> to vector<8x8xf32>
      %44 = arith.subf %31, %43 : vector<8x8xf32>
      %45 = math.exp %44 : vector<8x8xf32>
      %cst_21 = arith.constant dense<0.000000e+00> : vector<8xf32>
      %46 = vector.multi_reduction <add>, %45, %cst_21 [1] : vector<8x8xf32> to vector<8xf32>
      %47 = vector.shape_cast %46 : vector<8xf32> to vector<8x1xf32>
      %c0_22 = arith.constant 0 : index
      %c0_23 = arith.constant 0 : index
      %48 = vector.load %arg8[%c0_22, %c0_23] : memref<8x1xf32, #tpu.memory_space<vmem>>, vector<8x1xf32>
      tpu.vector_store %arg8[%c0_22, %c0_23], %47 {strides = array<i32>} : memref<8x1xf32, #tpu.memory_space<vmem>>, vector<8x1xf32>,
      %c0_24 = arith.constant 0 : index
      %c0_25 = arith.constant 0 : index
      %49 = vector.load %arg7[%c0_24, %c0_25] : memref<8x1xf32, #tpu.memory_space<vmem>>, vector<8x1xf32>
      tpu.vector_store %arg7[%c0_24, %c0_25], %42 {strides = array<i32>} : memref<8x1xf32, #tpu.memory_space<vmem>>, vector<8x1xf32>,
    } else {
    }
    %c0_i32_16 = arith.constant 0 : i32
    %35 = arith.cmpi ne, %arg1, %c0_i32_16 : i32
    %36 = arith.extui %35 : i1 to i32
    %c0_i32_17 = arith.constant 0 : i32
    %37 = arith.cmpi ne, %36, %c0_i32_17 : i32
    scf.if %37 {
      %c0_20 = arith.constant 0 : index
      %c0_21 = arith.constant 0 : index
      %41 = vector.load %arg7[%c0_20, %c0_21] : memref<8x1xf32, #tpu.memory_space<vmem>>, vector<8x1xf32>
      %cst_22 = arith.constant dense<0xFF800000> : vector<8xf32>
      %42 = vector.multi_reduction <maximumf>, %31, %cst_22 [1] : vector<8x8xf32> to vector<8xf32>
      %43 = vector.shape_cast %42 : vector<8xf32> to vector<8x1xf32>
      %44 = arith.maximumf %41, %43 : vector<8x1xf32>
      %c0_23 = arith.constant 0 : index
      %c0_24 = arith.constant 0 : index
      %45 = vector.load %arg8[%c0_23, %c0_24] : memref<8x1xf32, #tpu.memory_space<vmem>>, vector<8x1xf32>
      %46 = arith.subf %41, %44 : vector<8x1xf32>
      %47 = math.exp %46 : vector<8x1xf32>
      %48 = arith.mulf %45, %47 : vector<8x1xf32>
      %49 = vector.broadcast %44 : vector<8x1xf32> to vector<8x8xf32>
      %50 = arith.subf %31, %49 : vector<8x8xf32>
      %51 = math.exp %50 : vector<8x8xf32>
      %cst_25 = arith.constant dense<0.000000e+00> : vector<8xf32>
      %52 = vector.multi_reduction <add>, %51, %cst_25 [1] : vector<8x8xf32> to vector<8xf32>
      %53 = vector.shape_cast %52 : vector<8xf32> to vector<8x1xf32>
      %54 = arith.addf %48, %53 : vector<8x1xf32>
      %c0_26 = arith.constant 0 : index
      %c0_27 = arith.constant 0 : index
      %55 = vector.load %arg8[%c0_26, %c0_27] : memref<8x1xf32, #tpu.memory_space<vmem>>, vector<8x1xf32>
      tpu.vector_store %arg8[%c0_26, %c0_27], %54 {strides = array<i32>} : memref<8x1xf32, #tpu.memory_space<vmem>>, vector<8x1xf32>,
      %c0_28 = arith.constant 0 : index
      %c0_29 = arith.constant 0 : index
      %56 = vector.load %arg7[%c0_28, %c0_29] : memref<8x1xf32, #tpu.memory_space<vmem>>, vector<8x1xf32>
      tpu.vector_store %arg7[%c0_28, %c0_29], %44 {strides = array<i32>} : memref<8x1xf32, #tpu.memory_space<vmem>>, vector<8x1xf32>,
    } else {
    }
    %c0_i32_18 = arith.constant 0 : i32
    %38 = arith.cmpi eq, %arg1, %c0_i32_18 : i32
    %39 = arith.extui %38 : i1 to i32
    %c0_i32_19 = arith.constant 0 : i32
    %40 = arith.cmpi ne, %39, %c0_i32_19 : i32
    scf.if %40 {
      %c0_20 = arith.constant 0 : index
      %c0_21 = arith.constant 0 : index
      %41 = vector.load %arg7[%c0_20, %c0_21] : memref<8x1xf32, #tpu.memory_space<vmem>>, vector<8x1xf32>
      %c0_22 = arith.constant 0 : index
      %c0_23 = arith.constant 0 : index
      %42 = vector.load %arg8[%c0_22, %c0_23] : memref<8x1xf32, #tpu.memory_space<vmem>>, vector<8x1xf32>
      %43 = math.log %42 : vector<8x1xf32>
      %44 = arith.addf %41, %43 : vector<8x1xf32>
      %c0_24 = arith.constant 0 : index
      %45 = memref.load %arg3[%c0_24] : memref<1xf32, #tpu.memory_space<smem>>
      %46 = vector.broadcast %45 : f32 to vector<8x1xf32>
      %47 = arith.addf %44, %46 : vector<8x1xf32>
      %c0_25 = arith.constant 0 : index
      %c0_26 = arith.constant 0 : index
      %48 = vector.load %arg6[%c0_25, %c0_26] : memref<8x1xf32, #tpu.memory_space<vmem>>, vector<8x1xf32>
      tpu.vector_store %arg6[%c0_25, %c0_26], %47 {strides = array<i32>} : memref<8x1xf32, #tpu.memory_space<vmem>>, vector<8x1xf32>,
    } else {
    }
    return
  }
  func.func @transform_0(%arg0: i32, %arg1: i32) -> i32 {
    %c0_i32 = arith.constant 0 : i32
    %c0_i32_0 = arith.constant 0 : i32
    return %c0_i32 : i32
  }
  func.func @transform_1(%arg0: i32, %arg1: i32) -> i32 {
    %c0_i32 = arith.constant 0 : i32
    %c0_i32_0 = arith.constant 0 : i32
    return %c0_i32 : i32
  }
  func.func @transform_2(%arg0: i32, %arg1: i32) -> (i32, i32) {
    %c0_i32 = arith.constant 0 : i32
    %c0_i32_0 = arith.constant 0 : i32
    return %arg0, %c0_i32 : i32, i32
  }
  func.func @transform_3(%arg0: i32, %arg1: i32) -> (i32, i32) {
    %c0_i32 = arith.constant 0 : i32
    %c0_i32_0 = arith.constant 0 : i32
    %c0_i32_1 = arith.constant 0 : i32
    return %c0_i32, %c0_i32_0 : i32, i32
  }
  func.func @transform_4(%arg0: i32, %arg1: i32) -> (i32, i32) {
    %c0_i32 = arith.constant 0 : i32
    %c0_i32_0 = arith.constant 0 : i32
    return %arg0, %c0_i32 : i32, i32
  }
}

</mosaic_0001>

<llo_original>
// kernel: tpu_custom_call.1
$region0: #{tpu_custom_call.1}
  #allocation0 [shape = 'u32[]', space=smem, size = 0x4, offset = 0x4, fixed_abs, tag = 'smem constant byte address 0x4 - core index']
  #allocation1 [shape = 'u32[144,128]{1,0:T(1,128)}', space=vmem, size = 0x12000, scoped, tag = 'internal scratch']
  #allocation2 [shape = 'f32[8,1]{1,0:T(8,128)}', space=vmem, size = 0x1000, scoped, tag = 'scratch operand']
  #allocation3 [shape = 'f32[8,1]{1,0:T(8,128)}', space=vmem, size = 0x1000, scoped, tag = 'scratch operand']
  #allocation4 [shape = 'f32[1]{0:T(128)S(6)}', space=smem, size = 0x200, scoped, tag = 'scoped memory for tpu_custom_call.1']
  #allocation5 [shape = 'f32[1]{0:T(128)S(6)}', space=smem, size = 0x200, scoped, tag = 'scoped memory for tpu_custom_call.1']
  %s0 = inlined_call_operand.<no memory space> [shape: f32[1], index: 0, kind: input, shape index: {}]
  %s1 = inlined_call_operand.<no memory space> [shape: f32[1], index: 1, kind: input, shape index: {}]
  %s2 = inlined_call_operand.hbm [shape: f32[8,32], index: 2, kind: input, shape index: {}]
  %s3 = inlined_call_operand.vmem [shape: f32[8,32], index: 3, kind: input, shape index: {}]
  %s4 = inlined_call_operand.vmem [shape: f32[8,1], index: 4, kind: output, shape index: {}]
  %s5 = sld [smem:[#allocation0]]
  $region42: #{tpu_custom_call.1} parent=0
    _
  %s7 = ssub.s32 1, %s5
  %s8 = scalar_select 0, %s7, %s5
  %9 = sst [smem:[#allocation4]] %s0
  %10 = sst [smem:[#allocation5]] %s1
  $region1: #{tpu_custom_call.1} parent=0
    #allocation6 [shape = 'u8[4096]{0}', space=vmem, size = 0x1000, scoped, tag = 'input window, operand 2, single buffered']
    #allocation7 [shape = 's32[1]{0}', space=sflag, size = 0x4, scoped, tag = 'scoped memory for tpu_custom_call.1']
    %11 = vsyncpa [#allocation7], 0
    // Predicated region
    $region2: #{tpu_custom_call.1} parent=1 // pred_check
      _
    $region3: #{tpu_custom_call.1} parent=1 // pred_check_branch
      %13 = sbr.rel (0) target = $region5
    $region4: #{tpu_custom_call.1} parent=1 // pred_region
      _
    $region5: #{tpu_custom_call.1} parent=1 // pred_fallthru
      _
    // Predicated region
    $region6: #{tpu_custom_call.1} parent=1 // pred_check
      _
    $region7: #{tpu_custom_call.1} parent=1 // pred_check_branch
      %15 = sbr.rel (0) target = $region9
    $region8: #{tpu_custom_call.1} parent=1 // pred_region
      _
    $region9: #{tpu_custom_call.1} parent=1 // pred_fallthru
      _
    // Predicated region
    $region10: #{tpu_custom_call.1} parent=1 // pred_check
      _
    $region11: #{tpu_custom_call.1} parent=1 // pred_check_branch
      %17 = sbr.rel (0) target = $region13
    $region12: #{tpu_custom_call.1} parent=1 // pred_region
      %s19 = ssub.s32 128, 128
      %20 = vsyncadd [#allocation7], %s19
      %s22 = sshll.u32 [#allocation6], 4
      %s23 = int_to_ptr.vmem [resolvable:$true] %s22
      %25 = dma.hbm_to_vmem [thread:$0]  %s2, 128, %s23, [#allocation7]
    $region13: #{tpu_custom_call.1} parent=1 // pred_fallthru
      _
    // Predicated region
    $region14: #{tpu_custom_call.1} parent=1 // pred_check
      _
    $region15: #{tpu_custom_call.1} parent=1 // pred_check_branch
      %27 = sbr.rel (0) target = $region17
    $region16: #{tpu_custom_call.1} parent=1 // pred_region
      _
    $region17: #{tpu_custom_call.1} parent=1 // pred_fallthru
      _
    // Predicated region
    $region18: #{tpu_custom_call.1} parent=1 // pred_check
      _
    $region19: #{tpu_custom_call.1} parent=1 // pred_check_branch
      %29 = sbr.rel (0) target = $region21
    $region20: #{tpu_custom_call.1} parent=1 // pred_region
      %30 = dma.done [#allocation7], 128
    $region21: #{tpu_custom_call.1} parent=1 // pred_fallthru
      _
    %s31 = smul.u32 0, 8
    %p32 = scmp.lt.s32.totalorder %s31, 0
    %s33 = ssub.s32 0, %s31
    %s34 = scalar_select %p32, %s33, %s31
    %s35 = sand.u32 %s34, 7
    %s36 = ssub.s32 0, %s35
    %s37 = scalar_select %p32, %s36, %s35
    %p38 = scmp.ne.s32.totalorder %s37, 0
    %p39 = scmp.lt.s32.totalorder %s37, 0
    %p40 = pnand %p39, %p38
    %p41 = pneg %p40
    %s42 = sadd.s32 %s37, 8
    %s43 = scalar_select %p41, %s42, %s37
    %s44 = ssub.s32 %s31, %s43
    %s45 = smul.u32 0, 8
    %s46 = sadd.s32 %s44, %s45
    %p47 = scmp.lt.s32.totalorder %s46, 0
    %s48 = ssub.s32 0, %s46
    %s49 = scalar_select %p47, %s48, %s46
    %s50 = sand.u32 %s49, 7
    %s51 = ssub.s32 0, %s50
    %s52 = scalar_select %p47, %s51, %s50
    %p53 = scmp.ne.s32.totalorder %s52, 0
    %p54 = scmp.lt.s32.totalorder %s52, 0
    %p55 = pnand %p54, %p53
    %p56 = pneg %p55
    %s57 = sadd.s32 %s52, 8
    %s58 = scalar_select %p56, %s57, %s52
    %s59 = scalar_lea.vmem %s3, %s58
    %v60 = vld [vmem:[%s59] sm:$0xff]
    %v61 = vld [vmem:[#allocation6] sm:$0xff]
    %vm62 = vcmask 261120
    %v64 = vsel %vm62, %v61, 0
    %v67 = vsel %vm62, %v60, 0
    %69 = vmatprep.subr.mxu0 0.0
    %70 = vmatpush1.xpose.msra.mxu0 %v67
    %71 = vmatprep.subr.mxu0 0.0
    %72 = vmatpush1.xpose.msra.mxu0 0.0
    %73 = vmatprep.subr.mxu0 0.0
    %74 = vmatpush1.xpose.msra.mxu0 0.0
    %75 = vmatprep.subr.mxu0 0.0
    %76 = vmatpush1.xpose.msra.mxu0 0.0
    %77 = vmatprep.subr.mxu0 0.0
    %78 = vmatpush1.xpose.msra.mxu0 0.0
    %79 = vmatprep.subr.mxu0 0.0
    %80 = vmatpush1.xpose.msra.mxu0 0.0
    %81 = vmatprep.subr.mxu0 0.0
    %82 = vmatpush1.xpose.msra.mxu0 0.0
    %83 = vmatprep.subr.mxu0 0.0
    %84 = vmatpush1.xpose.msra.mxu0 0.0
    %85 = vmatprep.subr.mxu0 0.0
    %86 = vmatpush1.xpose.msra.mxu0 0.0
    %87 = vmatprep.subr.mxu0 0.0
    %88 = vmatpush1.xpose.msra.mxu0 0.0
    %89 = vmatprep.subr.mxu0 0.0
    %90 = vmatpush1.xpose.msra.mxu0 0.0
    %91 = vmatprep.subr.mxu0 0.0
    %92 = vmatpush1.xpose.msra.mxu0 0.0
    %93 = vmatprep.subr.mxu0 0.0
    %94 = vmatpush1.xpose.msra.mxu0 0.0
    %95 = vmatprep.subr.mxu0 0.0
    %96 = vmatpush1.xpose.msra.mxu0 0.0
    %97 = vmatprep.subr.mxu0 0.0
    %98 = vmatpush1.xpose.msra.mxu0 0.0
    %99 = vmatprep.subr.mxu0 0.0
    %100 = vmatpush1.xpose.msra.mxu0 0.0
    %101 = vmatprep.subr.mxu0 0.0
    %102 = vmatpush1.xpose.msra.mxu0 0.0
    %103 = vmatprep.subr.mxu0 0.0
    %104 = vmatpush1.xpose.msra.mxu0 0.0
    %105 = vmatprep.subr.mxu0 0.0
    %106 = vmatpush1.xpose.msra.mxu0 0.0
    %107 = vmatprep.subr.mxu0 0.0
    %108 = vmatpush1.xpose.msra.mxu0 0.0
    %109 = vmatprep.subr.mxu0 0.0
    %110 = vmatpush1.xpose.msra.mxu0 0.0
    %111 = vmatprep.subr.mxu0 0.0
    %112 = vmatpush1.xpose.msra.mxu0 0.0
    %113 = vmatprep.subr.mxu0 0.0
    %114 = vmatpush1.xpose.msra.mxu0 0.0
    %115 = vmatprep.subr.mxu0 0.0
    %116 = vmatpush1.xpose.msra.mxu0 0.0
    %117 = vmatprep.subr.mxu0 0.0
    %118 = vmatpush1.xpose.msra.mxu0 0.0
    %119 = vmatprep.subr.mxu0 0.0
    %120 = vmatpush1.xpose.msra.mxu0 0.0
    %121 = vmatprep.subr.mxu0 0.0
    %122 = vmatpush1.xpose.msra.mxu0 0.0
    %123 = vmatprep.subr.mxu0 0.0
    %124 = vmatpush1.xpose.msra.mxu0 0.0
    %125 = vmatprep.subr.mxu0 0.0
    %126 = vmatpush1.xpose.msra.mxu0 0.0
    %127 = vmatprep.subr.mxu0 0.0
    %128 = vmatpush1.xpose.msra.mxu0 0.0
    %129 = vmatprep.subr.mxu0 0.0
    %130 = vmatpush1.xpose.msra.mxu0 0.0
    %131 = vmatprep.subr.mxu0 0.0
    %132 = vmatpush1.xpose.msra.mxu0 0.0
    %133 = vmatprep.mubr.f32.mxu0 0.0
    %134 = vmatmul.mubr.f32.gmra.mrb[0].mxu0 %v64
    %v135 = vpop.f32.mrb[0].mxu0
    %v136 = vadd.f32 0.0, %v135
    %v137 = vpop.f32.mrb[0].mxu0
    %138 = vdwg.mxu0
    %s139 = sld [smem:[#allocation4]]
    %v140 = vstv %s139
    %v141 = vmul.f32 %v136, %v140
    %p142 = scmp.eq.s32.totalorder 0, 0
    // Predicated region
    $region22: #{tpu_custom_call.1} parent=1 // pred_check
      %p143 = pneg %p142
    $region23: #{tpu_custom_call.1} parent=1 // pred_check_branch
      %145 = sbr.rel (%p143) target = $region25
    $region24: #{tpu_custom_call.1} parent=1 // pred_region
      %vm146 = vcmask 64512
      %v147 = vsel %vm146, %v141, -inf
      %148 = vmax.xlane.f32.xlu0 %v147
      %v149 = vpop.xlane.xlu0 %148
      %v150 = vsub.f32 %v141, %v149
      %v151 = vmul.f32 %v150, 1.442695
      %v152 = vpow.pop %v151
      %v153 = vsel %vm146, %v152, 0.0
      %154 = vadd.xlane.f32.xlu0 %v153
      %v155 = vpop.xlane.xlu0 %154
      %vm156 = vcmask 7168
      %157 = vst.msk [vmem:[#allocation3] sm:$0xff] %vm156, %v155
      %158 = vst.msk [vmem:[#allocation2] sm:$0xff] %vm156, %v149
    $region25: #{tpu_custom_call.1} parent=1 // pred_fallthru
      _
    %p159 = scmp.ne.s32.totalorder 0, 0
    // Predicated region
    $region26: #{tpu_custom_call.1} parent=1 // pred_check
      %p160 = pneg %p159
    $region27: #{tpu_custom_call.1} parent=1 // pred_check_branch
      %162 = sbr.rel (%p160) target = $region29
    $region28: #{tpu_custom_call.1} parent=1 // pred_region
      %v163 = vld [vmem:[#allocation2] sm:$0xff]
      %vm164 = vcmask 64512
      %v165 = vsel %vm164, %v141, -inf
      %166 = vmax.xlane.f32.xlu0 %v165
      %v167 = vpop.xlane.xlu0 %166
      %v168 = vmax.f32 %v163, %v167
      %v169 = vld [vmem:[#allocation3] sm:$0xff]
      %v170 = vsub.f32 %v163, %v168
      %v171 = vmul.f32 %v170, 1.442695
      %v172 = vpow.pop %v171
      %v173 = vmul.f32 %v169, %v172
      %175 = vset.pattern.permute.xlu0 0
      %176 = vperm.xlu0 %175, %v168
      %v177 = vpop.permute.xlu0 %176
      %v179 = vsub.f32 %v141, %v177
      %v180 = vmul.f32 %v179, 1.442695
      %v181 = vpow.pop %v180
      %v182 = vsel %vm164, %v181, 0.0
      %183 = vadd.xlane.f32.xlu0 %v182
      %v184 = vpop.xlane.xlu0 %183
      %v185 = vadd.f32 %v173, %v184
      %vm186 = vcmask 7168
      %187 = vst.msk [vmem:[#allocation3] sm:$0xff] %vm186, %v185
      %188 = vst.msk [vmem:[#allocation2] sm:$0xff] %vm186, %v168
    $region29: #{tpu_custom_call.1} parent=1 // pred_fallthru
      _
    // Predicated region
    $region30: #{tpu_custom_call.1} parent=1 // pred_check
      %p189 = pneg %p142
    $region31: #{tpu_custom_call.1} parent=1 // pred_check_branch
      %191 = sbr.rel (%p189) target = $region33
    $region32: #{tpu_custom_call.1} parent=1 // pred_region
      %v192 = vld [vmem:[#allocation2] sm:$0xff]
      %v193 = vld [vmem:[#allocation3] sm:$0xff]
      %v194 = vlog2.pop %v193
      %v195 = vmul.f32 %v194, 0.6931472
      %v196 = vadd.f32 %v192, %v195
      %s197 = sld [smem:[#allocation5]]
      %v198 = vstv %s197
      %v199 = vadd.f32 %v196, %v198
      %vm200 = vcmask 7168
      %201 = vst.msk [vmem:[%s4] sm:$0xff] %vm200, %v199
    $region33: #{tpu_custom_call.1} parent=1 // pred_fallthru
      _
    // Predicated region
    $region34: #{tpu_custom_call.1} parent=1 // pred_check
      _
    $region35: #{tpu_custom_call.1} parent=1 // pred_check_branch
      %203 = sbr.rel (0) target = $region37
    $region36: #{tpu_custom_call.1} parent=1 // pred_region
      _
    $region37: #{tpu_custom_call.1} parent=1 // pred_fallthru
      _
    // Predicated region
    $region38: #{tpu_custom_call.1} parent=1 // pred_check
      _
    $region39: #{tpu_custom_call.1} parent=1 // pred_check_branch
      %205 = sbr.rel (0) target = $region41
    $region40: #{tpu_custom_call.1} parent=1 // pred_region
      _
    $region41: #{tpu_custom_call.1} parent=1 // pred_fallthru
      _
    %206 = vsyncpa [#allocation7], 1

</llo_original>
